<compile_context>
chip_gen: v7x
topology: tpu7x:2x2x1
jax: 0.10.0
libtpu: 0.0.40
codegen_flags: <defaults>
</compile_context>

<pallas_src>
import math

import jax
import jax.numpy as jnp
from jax.experimental import pallas as pl
from jax.experimental.pallas import tpu as pltpu


# --------------------------------------------------------------------------- utilities

def _pad_to(n: int, m: int) -> int:
    return -(-n // m) * m


def _sublane_multiple(dtype) -> int:
    """Sublane packing for the dtype: 8 (f32), 16 (bf16/f16), 32 (int8/fp8)."""
    itemsize = jnp.dtype(dtype).itemsize
    return max(8, 32 // max(1, itemsize))


def _center_coords(size: int):
    """Pixel-space center coordinate for align_corners=False at normalized coord 0."""
    f = (size - 1) / 2.0
    i0 = int(math.floor(f))
    i1 = min(i0 + 1, size - 1)
    frac = f - i0
    return i0, i1, frac


def _axis_window(size: int, mode: str):
    """(start, extent, weights) of the minimal window needed along one spatial axis."""
    i0, i1, frac = _center_coords(size)
    if mode == "nearest":
        # round-half-to-even matches std::nearbyint used by PyTorch's CPU grid_sampler.
        # TODO(synk): some PyTorch backends round half-ties away from zero for nearest.
        n = int(round((size - 1) / 2.0))
        n = min(max(n, 0), size - 1)
        return n, 1, (1.0,)
    # bilinear
    if frac > 0.0 and i1 != i0:
        return i0, 2, (1.0 - frac, frac)
    return i0, 1, (1.0,)


def _pick_batch_tile(B: int, bytes_per_b: int, align: int) -> int:
    """Tile size along the (tiled) batch axis.

    Constraints:
      * live VMEM = double-buffered, tile-padded input block (K taps) + output block
        stays <= ~8 MiB  -> fits v5e's 16 MiB scoped-VMEM default and v7x's 32 MiB
        default (64 MiB physical) with headroom;
      * when the problem is big enough for pipelining to matter, >= 8 grid steps
        (>= 4 per TensorCore on v7x megacore) so inbound DMA / writeback stay hidden;
      * TB aligned to `align` (dtype sublane packing when TB is the sublane dim,
        128 when TB is the lane dim).
    """
    VMEM_BUDGET = 8 * 1024 * 1024
    MIN_BLOCK_BYTES = 256 * 1024   # below this, per-step overhead (~0.35 us) dominates
    MIN_STEPS = 8
    if B <= align:
        return B
    # Largest aligned tile that fits the padded + double-buffered budget.
    tb = max(align, (VMEM_BUDGET // max(1, bytes_per_b)) // align * align)
    # Enough grid steps for pipelining, unless blocks would become trivially small.
    tb_steps = -(-B // MIN_STEPS)
    tb_steps = max(align, _pad_to(tb_steps, align))
    if tb_steps * bytes_per_b >= MIN_BLOCK_BYTES:
        tb = min(tb, tb_steps)
    return min(tb, B)


# ------------------------------------------------------------------------------ kernel

def _make_grab_center_kernel(weights):
    """Weighted sum of K taps; each x_ref[k] is a dense 2-D (rows, lanes) slab."""
    K = len(weights)
    uniform = all(w == weights[0] for w in weights)

    def kernel(x_ref, o_ref):
        # x_ref block: (K, R, L); o_ref block: (R, L).  K is the leading axis, so every
        # tap is a full (8,128)-tiled vreg slab -- no cross-sublane extraction.
        acc = x_ref[0].astype(jnp.float32)
        if uniform:
            for k in range(1, K):
                acc = acc + x_ref[k].astype(jnp.float32)
            if weights[0] != 1.0:
                acc = weights[0] * acc
        else:
            if weights[0] != 1.0:
                acc = weights[0] * acc
            for k in range(1, K):
                w = weights[k]
                if w == 0.0:
                    continue
                tap = x_ref[k].astype(jnp.float32)
                acc = acc + (tap if w == 1.0 else w * tap)
        o_ref[...] = acc.astype(o_ref.dtype)

    return kernel


# ----------------------------------------------------------------------------- wrapper

def grab_center_pallas(x_nchw: jax.Array, mode: str = "bilinear") -> jax.Array:
    """Pallas equivalent of GrabCenter.forward. Input NCHW, output (B, C)."""
    if mode not in ("bilinear", "nearest"):
        raise ValueError(f"unsupported mode: {mode}")  # TODO(synk): 'bicubic' not implemented
    B, C, H, W = x_nchw.shape
    dtype = x_nchw.dtype
    itemsize = jnp.dtype(dtype).itemsize
    sub = _sublane_multiple(dtype)

    ys, ny, wy = _axis_window(H, mode)
    xs, nx, wx = _axis_window(W, mode)
    K = ny * nx
    weights = tuple(wy[i] * wx[j] for i in range(ny) for j in range(nx))
    kernel = _make_grab_center_kernel(weights)

    # Pre-slice the tiny center window (<= 2x2) -- HBM traffic is ~B*K*C, never B*H*W*C.
    # The slice + transpose + reshape below is one fused XLA relayout pass; producing the
    # window directly in (K, ..., ...) order at the producer would remove even that.
    win = x_nchw[:, :, ys:ys + ny, xs:xs + nx]            # (B, C, ny, nx)

    # Lane-axis choice: put whichever of (channels, batch) wastes fewer lanes on the
    # 128-lane axis.  C on lanes keeps the natural (B, C) output; batch-on-lanes (the
    # common C < 128 case) gives dense unmasked stores at the cost of a tiny transpose.
    if C % 128 == 0:
        lane_is_batch = False
    else:
        lane_is_batch = _pad_to(B, 128) * C < _pad_to(C, 128) * B

    # Padded, double-buffered live bytes per batch element: 2 buffers x (K taps + output).
    # TODO(synk): channels are not tiled; for pathological C (> ~25k) add a C grid axis.
    if lane_is_batch:
        # Layout B: (K, C, B) -- batch on lanes, channels on sublanes.
        win = jnp.transpose(win, (2, 3, 1, 0)).reshape(K, C, B)
        bytes_per_b = 2 * (K + 1) * _pad_to(C, sub) * itemsize
        TB = _pick_batch_tile(B, bytes_per_b, align=128)
        grid = (pl.cdiv(B, TB),)
        out_cb = pl.pallas_call(
            kernel,
            out_shape=jax.ShapeDtypeStruct((C, B), dtype),
            grid=grid,
            in_specs=[pl.BlockSpec((K, C, TB), lambda b: (0, 0, b))],
            out_specs=pl.BlockSpec((C, TB), lambda b: (0, b)),
            compiler_params=pltpu.CompilerParams(
                dimension_semantics=("parallel",),
            ),
        )(win)
        return jnp.transpose(out_cb)                      # (B, C)

    # Layout A: (K, B, C) -- channels on lanes, batch tile on sublanes.
    win = jnp.transpose(win, (2, 3, 0, 1)).reshape(K, B, C)
    bytes_per_b = 2 * (K + 1) * _pad_to(C, 128) * itemsize
    TB = _pick_batch_tile(B, bytes_per_b, align=sub)
    grid = (pl.cdiv(B, TB),)
    out = pl.pallas_call(
        kernel,
        out_shape=jax.ShapeDtypeStruct((B, C), dtype),
        grid=grid,
        in_specs=[pl.BlockSpec((K, TB, C), lambda b: (0, b, 0))],
        out_specs=pl.BlockSpec((TB, C), lambda b: (b, 0)),
        compiler_params=pltpu.CompilerParams(
            dimension_semantics=("parallel",),
        ),
    )(win)
    return out


def _grab_center_ref(x_nchw: jax.Array, mode: str = "bilinear") -> jax.Array:
    """Pure-JAX reference of the same semantics (for validation)."""
    B, C, H, W = x_nchw.shape
    y0, y1, dy = _center_coords(H)
    x0, x1, dx = _center_coords(W)
    if mode == "nearest":
        yn = min(max(int(round((H - 1) / 2.0)), 0), H - 1)
        xn = min(max(int(round((W - 1) / 2.0)), 0), W - 1)
        return x_nchw[:, :, yn, xn]
    xf = x_nchw.astype(jnp.float32)
    out = ((1 - dy) * (1 - dx) * xf[:, :, y0, x0]
           + (1 - dy) * dx * xf[:, :, y0, x1]
           + dy * (1 - dx) * xf[:, :, y1, x0]
           + dy * dx * xf[:, :, y1, x1])
    return out.astype(x_nchw.dtype)


class GrabCenter:
    """JAX/Pallas port of mlutils.layer.grab_center.GrabCenter (no parameters)."""

    def __init__(self, mode: str = "bilinear"):
        self._mode = mode

    def __call__(self, x: jax.Array) -> jax.Array:
        return grab_center_pallas(x, self._mode)


if __name__ == "__main__":
    key = jax.random.PRNGKey(0)
    x = jax.random.normal(key, (2, 4, 16, 16), dtype=jnp.float32)   # NCHW

    module = GrabCenter(mode="bilinear")
    out = jax.block_until_ready(module(x))
    ref = _grab_center_ref(x, "bilinear")
    assert out.shape == (2, 4), out.shape
    assert jnp.allclose(out, ref, atol=1e-5, rtol=1e-5), "mismatch vs reference (bilinear)"

    k1, k2 = jax.random.split(key)

    # odd spatial size (single-pixel center path) + nearest mode
    x2 = jax.random.normal(k1, (3, 8, 15, 17), dtype=jnp.float32)
    o2 = jax.block_until_ready(grab_center_pallas(x2, "bilinear"))
    assert jnp.allclose(o2, _grab_center_ref(x2, "bilinear"), atol=1e-5, rtol=1e-5)
    o3 = jax.block_until_ready(grab_center_pallas(x2, "nearest"))
    assert jnp.allclose(o3, _grab_center_ref(x2, "nearest"), atol=1e-5, rtol=1e-5)

    # batch-on-lanes layout (C < 128, larger B) and channels-on-lanes (C multiple of 128)
    x3 = jax.random.normal(k2, (160, 8, 10, 12), dtype=jnp.float32)
    o4 = jax.block_until_ready(grab_center_pallas(x3, "bilinear"))
    assert jnp.allclose(o4, _grab_center_ref(x3, "bilinear"), atol=1e-5, rtol=1e-5)

    x4 = jax.random.normal(k2, (4, 128, 6, 6), dtype=jnp.float32)
    o5 = jax.block_until_ready(grab_center_pallas(x4, "bilinear"))
    assert jnp.allclose(o5, _grab_center_ref(x4, "bilinear"), atol=1e-5, rtol=1e-5)

    print("KERNEL_OK")
</pallas_src>

<mosaic_0001>
module attributes {stable_mosaic.version = 11 : i64} {
  func.func @kernel(%arg0: i32, %arg1: memref<4x2x4xf32, #tpu.memory_space<vmem>>, %arg2: memref<2x4xf32, #tpu.memory_space<vmem>>) attributes {dimension_semantics = [#tpu.dimension_semantics<parallel>], iteration_bounds = array<i64: 1>, scalar_prefetch = 0 : i64, scratch_operands = 0 : i64, tpu.core_type = #tpu.core_type<tc>, window_params = [{transform_indices = @transform_0, window_bounds = array<i64: 4, 2, 4>}, {transform_indices = @transform_1, window_bounds = array<i64: 2, 4>}]} {
    %c0 = arith.constant 0 : index
    %c0_0 = arith.constant 0 : index
    %c0_1 = arith.constant 0 : index
    %0 = vector.load %arg1[%c0, %c0_0, %c0_1] : memref<4x2x4xf32, #tpu.memory_space<vmem>>, vector<1x2x4xf32>
    %1 = vector.shape_cast %0 : vector<1x2x4xf32> to vector<2x4xf32>
    %c1 = arith.constant 1 : index
    %c0_2 = arith.constant 0 : index
    %c0_3 = arith.constant 0 : index
    %2 = vector.load %arg1[%c1, %c0_2, %c0_3] : memref<4x2x4xf32, #tpu.memory_space<vmem>>, vector<1x2x4xf32>
    %3 = vector.shape_cast %2 : vector<1x2x4xf32> to vector<2x4xf32>
    %4 = arith.addf %1, %3 : vector<2x4xf32>
    %c2 = arith.constant 2 : index
    %c0_4 = arith.constant 0 : index
    %c0_5 = arith.constant 0 : index
    %5 = vector.load %arg1[%c2, %c0_4, %c0_5] : memref<4x2x4xf32, #tpu.memory_space<vmem>>, vector<1x2x4xf32>
    %6 = vector.shape_cast %5 : vector<1x2x4xf32> to vector<2x4xf32>
    %7 = arith.addf %4, %6 : vector<2x4xf32>
    %c3 = arith.constant 3 : index
    %c0_6 = arith.constant 0 : index
    %c0_7 = arith.constant 0 : index
    %8 = vector.load %arg1[%c3, %c0_6, %c0_7] : memref<4x2x4xf32, #tpu.memory_space<vmem>>, vector<1x2x4xf32>
    %9 = vector.shape_cast %8 : vector<1x2x4xf32> to vector<2x4xf32>
    %10 = arith.addf %7, %9 : vector<2x4xf32>
    %cst = arith.constant 2.500000e-01 : f32
    %11 = vector.broadcast %cst : f32 to vector<2x4xf32>
    %12 = arith.mulf %11, %10 : vector<2x4xf32>
    %c0_8 = arith.constant 0 : index
    %c0_9 = arith.constant 0 : index
    %13 = vector.load %arg2[%c0_8, %c0_9] : memref<2x4xf32, #tpu.memory_space<vmem>>, vector<2x4xf32>
    tpu.vector_store %arg2[%c0_8, %c0_9], %12 {strides = array<i32>} : memref<2x4xf32, #tpu.memory_space<vmem>>, vector<2x4xf32>,
    return
  }
  func.func @transform_0(%arg0: i32) -> (i32, i32, i32) {
    %c0_i32 = arith.constant 0 : i32
    %c0_i32_0 = arith.constant 0 : i32
    %c0_i32_1 = arith.constant 0 : i32
    return %c0_i32, %arg0, %c0_i32_0 : i32, i32, i32
  }
  func.func @transform_1(%arg0: i32) -> (i32, i32) {
    %c0_i32 = arith.constant 0 : i32
    %c0_i32_0 = arith.constant 0 : i32
    return %arg0, %c0_i32 : i32, i32
  }
}

</mosaic_0001>

<llo_original>
// kernel: tpu_custom_call.1
$region0: #{tpu_custom_call.1}
  #allocation0 [shape = 'u32[]', space=smem, size = 0x4, offset = 0x4, fixed_abs, tag = 'smem constant byte address 0x4 - core index']
  #allocation1 [shape = 'u32[144,128]{1,0:T(1,128)}', space=vmem, size = 0x12000, scoped, tag = 'internal scratch']
  %s0 = inlined_call_operand.hbm [shape: f32[4,2,4], index: 0, kind: input, shape index: {}]
  %s1 = inlined_call_operand.hbm [shape: f32[2,4], index: 1, kind: output, shape index: {}]
  %s2 = sld [smem:[#allocation0]]
  $region18: #{tpu_custom_call.1} parent=0
    _
  %s4 = ssub.s32 1, %s2
  %s5 = scalar_select 0, %s4, %s2
  $region1: #{tpu_custom_call.1} parent=0
    #allocation2 [shape = 'u8[4096]{0}', space=vmem, size = 0x1000, scoped, tag = 'input window, operand 0, single buffered']
    #allocation3 [shape = 's32[1]{0}', space=sflag, size = 0x4, scoped, tag = 'scoped memory for tpu_custom_call.1']
    #allocation4 [shape = 's32[1]{0}', space=sflag, size = 0x4, scoped, tag = 'scoped memory for tpu_custom_call.1']
    #allocation5 [shape = 'u8[1024]{0}', space=vmem, size = 0x400, scoped, tag = 'output window, operand 0, single buffered']
    %6 = vsyncpa [#allocation3], 0
    %7 = vsyncpa [#allocation4], 0
    // Predicated region
    $region2: #{tpu_custom_call.1} parent=1 // pred_check
      _
    $region3: #{tpu_custom_call.1} parent=1 // pred_check_branch
      %9 = sbr.rel (0) target = $region5
    $region4: #{tpu_custom_call.1} parent=1 // pred_region
      %s11 = ssub.s32 128, 128
      %12 = vsyncadd [#allocation3], %s11
      %s13 = sshll.u32 [#allocation2], 4
      %s14 = int_to_ptr.vmem [resolvable:$true] %s13
      %19 = dma.hbm_to_vmem [thread:$0]  %s0, 128, %s14, [#allocation3], 32, 32, 2
    $region5: #{tpu_custom_call.1} parent=1 // pred_fallthru
      _
    // Predicated region
    $region6: #{tpu_custom_call.1} parent=1 // pred_check
      _
    $region7: #{tpu_custom_call.1} parent=1 // pred_check_branch
      %21 = sbr.rel (0) target = $region9
    $region8: #{tpu_custom_call.1} parent=1 // pred_region
      %22 = dma.done [#allocation3], 128
    $region9: #{tpu_custom_call.1} parent=1 // pred_fallthru
      _
    %v23 = vld [vmem:[#allocation2] sm:$0x3]
    %s24 = scalar_lea.vmem [#allocation2], 2
    %v25 = vld [vmem:[%s24] sm:$0x3]
    %v26 = vadd.f32 %v23, %v25
    %s27 = scalar_lea.vmem [#allocation2], 4
    %v28 = vld [vmem:[%s27] sm:$0x3]
    %v29 = vadd.f32 %v26, %v28
    %s30 = scalar_lea.vmem [#allocation2], 6
    %v31 = vld [vmem:[%s30] sm:$0x3]
    %v32 = vadd.f32 %v29, %v31
    %v33 = vmul.f32 %v32, 0.25
    %vm34 = vcmask 25600
    %35 = vst.msk [vmem:[#allocation5] sm:$0x3] %vm34, %v33
    // Predicated region
    $region10: #{tpu_custom_call.1} parent=1 // pred_check
      _
    $region11: #{tpu_custom_call.1} parent=1 // pred_check_branch
      %37 = sbr.rel (0) target = $region13
    $region12: #{tpu_custom_call.1} parent=1 // pred_region
      %s39 = ssub.s32 32, 32
      %40 = vsyncadd [#allocation4], %s39
      %s42 = sshll.u32 [#allocation5], 4
      %s43 = int_to_ptr.vmem [resolvable:$true] %s42
      %45 = dma.vmem_to_hbm [thread:$0]  %s43, 32, %s1, [#allocation4]
    $region13: #{tpu_custom_call.1} parent=1 // pred_fallthru
      _
    // Predicated region
    $region14: #{tpu_custom_call.1} parent=1 // pred_check
      _
    $region15: #{tpu_custom_call.1} parent=1 // pred_check_branch
      %47 = sbr.rel (0) target = $region17
    $region16: #{tpu_custom_call.1} parent=1 // pred_region
      %48 = dma.done [#allocation4], 32
    $region17: #{tpu_custom_call.1} parent=1 // pred_fallthru
      _
    %49 = vsyncpa [#allocation3], 1
    %50 = vsyncpa [#allocation4], 1

</llo_original>
